<compile_context>
chip_gen: v7x
topology: tpu7x:2x2x1
jax: 0.10.0
libtpu: 0.0.40
codegen_flags: <defaults>
</compile_context>

<pallas_src>
import jax
import jax.numpy as jnp
from jax.experimental import pallas as pl
from jax.experimental.pallas import tpu as pltpu

LANE = 128
_TARGET_TILE_BYTES = 2 * 1024 * 1024  # ~2 MiB per input tile


def _sigm_adjust_kernel(alpha_ref, u_ref, o_ref):
    alpha = alpha_ref[0]                            # scalar from SMEM
    u = u_ref[...].astype(jnp.float32)              # in-VMEM upcast (VPU has slack)
    # 2/(1+exp(-a*u)) - 1 == tanh(a*u/2): single EUP op, no exp overflow
    o_ref[...] = jnp.tanh(0.5 * alpha * u).astype(o_ref.dtype)


def _choose_block_rows(rows: int, itemsize: int) -> int:
    """Largest row-tile that keeps VMEM modest and leaves >=2 grid steps for
    large inputs (so dimension_semantics=('parallel',) can shard on v7x)."""
    max_rows = max(8, (_TARGET_TILE_BYTES // (LANE * itemsize)) // 8 * 8)
    total_bytes = rows * LANE * itemsize
    if total_bytes >= (1 << 20):                    # >=1 MiB: want >=2 grid steps
        half = ((rows + 1) // 2 + 7) // 8 * 8       # ceil(rows/2) rounded to 8
        max_rows = min(max_rows, half)
    if rows <= max_rows:
        return rows                                  # single full-extent block
    return max_rows


@jax.jit
def _sigm_adjust_impl(u: jax.Array, alpha_arr: jax.Array) -> jax.Array:
    orig_shape = u.shape
    if not jnp.issubdtype(u.dtype, jnp.floating):
        u = u.astype(jnp.float32)
    io_dtype = u.dtype                               # native dtype through HBM

    flat = u.reshape(-1)
    n = flat.shape[0]
    pad = (-n) % LANE                                # pad only to one lane-width
    if pad:
        flat = jnp.pad(flat, (0, pad))
    rows = flat.shape[0] // LANE
    x2d = flat.reshape(rows, LANE)

    block_rows = _choose_block_rows(rows, jnp.dtype(io_dtype).itemsize)
    grid = (pl.cdiv(rows, block_rows),)              # cdiv: no tail-row drop

    out2d = pl.pallas_call(
        _sigm_adjust_kernel,
        out_shape=jax.ShapeDtypeStruct((rows, LANE), io_dtype),
        grid_spec=pltpu.PrefetchScalarGridSpec(
            num_scalar_prefetch=0,
            grid=grid,
            in_specs=[
                pl.BlockSpec(memory_space=pltpu.MemorySpace.SMEM),   # alpha (1,)
                pl.BlockSpec((block_rows, LANE), lambda i: (i, 0)),
            ],
            out_specs=pl.BlockSpec((block_rows, LANE), lambda i: (i, 0)),
        ),
        compiler_params=pltpu.CompilerParams(
            dimension_semantics=("parallel",),
            vmem_limit_bytes=32 * 1024 * 1024,
        ),
    )(alpha_arr, x2d)

    out = out2d.reshape(-1)
    if pad:
        out = out[:n]
    return out.reshape(orig_shape)


class SigmAdjust:
    """Port of the PyTorch Sigm_Adjust module, including its global
    alpha / flag bookkeeping (host-side Python scalar state)."""

    def __init__(self):
        self.alpha = 2.0
        self.flag = 0

    def __call__(self, u: jax.Array, iteration) -> jax.Array:
        if iteration > self.flag:
            self.alpha = self.alpha + 0.2
        self.flag = iteration
        alpha_arr = jnp.asarray([self.alpha], dtype=jnp.float32)
        return _sigm_adjust_impl(u, alpha_arr)


if __name__ == "__main__":
    key = jax.random.PRNGKey(0)
    # NCHW feature map, small deterministic test shape
    x = jax.random.normal(key, (2, 4, 16, 16), dtype=jnp.float32)

    mod = SigmAdjust()

    # Iteration 1 > flag(0)  ->  alpha becomes 2.2
    y = mod(x, 1)
    jax.block_until_ready(y)
    y_ref = 2.0 / (1.0 + jnp.exp(-2.2 * x)) - 1.0
    assert y.shape == x.shape and y.dtype == x.dtype
    assert jnp.max(jnp.abs(y - y_ref)) < 1e-5

    # Iteration 2 > flag(1)  ->  alpha becomes 2.4 (no recompile: alpha is a
    # runtime SMEM scalar)
    y2 = mod(x, 2)
    jax.block_until_ready(y2)
    y2_ref = 2.0 / (1.0 + jnp.exp(-2.4 * x)) - 1.0
    assert jnp.max(jnp.abs(y2 - y2_ref)) < 1e-5

    print("KERNEL_OK")
</pallas_src>

<mosaic_0001>
module attributes {stable_mosaic.version = 11 : i64} {
  func.func @_sigm_adjust_kernel(%arg0: i32, %arg1: memref<1xf32, #tpu.memory_space<smem>>, %arg2: memref<16x128xf32, #tpu.memory_space<vmem>>, %arg3: memref<16x128xf32, #tpu.memory_space<vmem>>) attributes {dimension_semantics = [#tpu.dimension_semantics<parallel>], iteration_bounds = array<i64: 1>, scalar_prefetch = 0 : i64, scratch_operands = 0 : i64, tpu.core_type = #tpu.core_type<tc>, window_params = [{transform_indices = @transform_0, window_bounds = array<i64: 1>}, {transform_indices = @transform_1, window_bounds = array<i64: 16, 128>}, {transform_indices = @transform_2, window_bounds = array<i64: 16, 128>}]} {
    %c0 = arith.constant 0 : index
    %0 = memref.load %arg1[%c0] : memref<1xf32, #tpu.memory_space<smem>>
    %c0_0 = arith.constant 0 : index
    %c0_1 = arith.constant 0 : index
    %1 = vector.load %arg2[%c0_0, %c0_1] : memref<16x128xf32, #tpu.memory_space<vmem>>, vector<16x128xf32>
    %cst = arith.constant 5.000000e-01 : f32
    %2 = arith.mulf %cst, %0 : f32
    %3 = vector.broadcast %2 : f32 to vector<16x128xf32>
    %4 = arith.mulf %3, %1 : vector<16x128xf32>
    %5 = math.tanh %4 : vector<16x128xf32>
    %c0_2 = arith.constant 0 : index
    %c0_3 = arith.constant 0 : index
    %6 = vector.load %arg3[%c0_2, %c0_3] : memref<16x128xf32, #tpu.memory_space<vmem>>, vector<16x128xf32>
    tpu.vector_store %arg3[%c0_2, %c0_3], %5 {strides = array<i32>} : memref<16x128xf32, #tpu.memory_space<vmem>>, vector<16x128xf32>,
    return
  }
  func.func @transform_0(%arg0: i32) -> i32 {
    %c0_i32 = arith.constant 0 : i32
    %c0_i32_0 = arith.constant 0 : i32
    return %c0_i32 : i32
  }
  func.func @transform_1(%arg0: i32) -> (i32, i32) {
    %c0_i32 = arith.constant 0 : i32
    %c0_i32_0 = arith.constant 0 : i32
    return %arg0, %c0_i32 : i32, i32
  }
  func.func @transform_2(%arg0: i32) -> (i32, i32) {
    %c0_i32 = arith.constant 0 : i32
    %c0_i32_0 = arith.constant 0 : i32
    return %arg0, %c0_i32 : i32, i32
  }
}

</mosaic_0001>

<llo_original>
// kernel: _sigm_adjust_impl.1
$region0: #{_sigm_adjust_impl.1}
  #allocation0 [shape = 'u32[]', space=smem, size = 0x4, offset = 0x4, fixed_abs, tag = 'smem constant byte address 0x4 - core index']
  #allocation1 [shape = 'u32[144,128]{1,0:T(1,128)}', space=vmem, size = 0x12000, scoped, tag = 'internal scratch']
  #allocation2 [shape = 'f32[1]{0:T(128)S(6)}', space=smem, size = 0x200, scoped, tag = 'scoped memory for _sigm_adjust_impl.1']
  %s0 = inlined_call_operand.<no memory space> [shape: f32[1], index: 0, kind: input, shape index: {}]
  %s1 = inlined_call_operand.vmem [shape: f32[16,128], index: 1, kind: input, shape index: {}]
  %s2 = inlined_call_operand.vmem [shape: f32[16,128], index: 2, kind: output, shape index: {}]
  %s3 = sld [smem:[#allocation0]]
  $region18: #{_sigm_adjust_impl.1} parent=0
    _
  %s5 = ssub.s32 1, %s3
  %s6 = scalar_select 0, %s5, %s3
  %7 = sst [smem:[#allocation2]] %s0
  // Predicated region
  $region2: #{_sigm_adjust_impl.1} parent=0 // pred_check
    _
  $region3: #{_sigm_adjust_impl.1} parent=0 // pred_check_branch
    %9 = sbr.rel (0) target = $region5
  $region4: #{_sigm_adjust_impl.1} parent=0 // pred_region
    _
  $region5: #{_sigm_adjust_impl.1} parent=0 // pred_fallthru
    _
  // Predicated region
  $region6: #{_sigm_adjust_impl.1} parent=0 // pred_check
    _
  $region7: #{_sigm_adjust_impl.1} parent=0 // pred_check_branch
    %11 = sbr.rel (0) target = $region9
  $region8: #{_sigm_adjust_impl.1} parent=0 // pred_region
    _
  $region9: #{_sigm_adjust_impl.1} parent=0 // pred_fallthru
    _
  %s12 = sld [smem:[#allocation2]]
  %v13 = vld [vmem:[%s1] sm:$0xff]
  %v14 = vld [vmem:[%s1 + $0x8] sm:$0xff]
  %s15 = smul.f32 %s12, 0.5
  %v16 = vstv %s15
  %v17 = vmul.f32 %v16, %v13
  %v18 = vmul.f32 %v16, %v14
  %v19 = vtanh.pop %v17
  %v20 = vtanh.pop %v18
  %21 = vst [vmem:[%s2] sm:$0xff] %v19
  %22 = vst [vmem:[%s2 + $0x8] sm:$0xff] %v20
  // Predicated region
  $region10: #{_sigm_adjust_impl.1} parent=0 // pred_check
    _
  $region11: #{_sigm_adjust_impl.1} parent=0 // pred_check_branch
    %24 = sbr.rel (0) target = $region13
  $region12: #{_sigm_adjust_impl.1} parent=0 // pred_region
    _
  $region13: #{_sigm_adjust_impl.1} parent=0 // pred_fallthru
    _
  // Predicated region
  $region14: #{_sigm_adjust_impl.1} parent=0 // pred_check
    _
  $region15: #{_sigm_adjust_impl.1} parent=0 // pred_check_branch
    %26 = sbr.rel (0) target = $region17
  $region16: #{_sigm_adjust_impl.1} parent=0 // pred_region
    _
  $region17: #{_sigm_adjust_impl.1} parent=0 // pred_fallthru
    _

</llo_original>
